<compile_context>
chip_gen: v7x
topology: tpu7x:2x2x1
jax: 0.10.0
libtpu: 0.0.40
codegen_flags: <defaults>
</compile_context>

<pallas_src>
import functools

import jax
import jax.numpy as jnp
from jax.experimental import pallas as pl
from jax.experimental.pallas import tpu as pltpu


def _trend_fused_kernel(x_ref, wf_ref, wp_ref, b_ref, out_ref):
    """One batch element, all scales fused.

    x_ref  : (1, Ltot, K)   concat over scales of [x_prev | x | x_next | mark]
    wf_ref : (K, C_out)     embedding weights pre-multiplied by projection
    wp_ref : (P, Ltot)      concat over scales of predict_layers[i].weight
    b_ref  : (P, C_out)     fully folded bias (predict bias * proj colsum + n*proj bias)
    out_ref: (1, P, C_out)
    """
    e = jnp.dot(x_ref[0], wf_ref[...], preferred_element_type=jnp.float32)   # [Ltot, C_out]
    out = jnp.dot(wp_ref[...], e, preferred_element_type=jnp.float32) + b_ref[...]
    out_ref[0] = out.astype(out_ref.dtype)


def _build_multiscale_input(x_enc, x_mark, scale_window, scale_num):
    """Builds concat-over-scales of [roll(x,+1) | x | roll(x,-1) | mark] along time."""
    segs = []
    x_c, m_c = x_enc, x_mark
    for i in range(scale_num + 1):
        if i > 0:
            B, L, C = x_c.shape
            assert L % scale_window == 0, "seq_len must be divisible by scale_window**scale_num"
            # AvgPool1d(scale_window) over time (applied on [B, C, L] in torch).
            x_c = x_c.reshape(B, L // scale_window, scale_window, C).mean(axis=2)
            m_c = m_c[:, ::scale_window, :]
        x_prev = jnp.roll(x_c, 1, axis=1)    # circular padding, left neighbor
        x_next = jnp.roll(x_c, -1, axis=1)   # circular padding, right neighbor
        segs.append(jnp.concatenate([x_prev, x_c, x_next, m_c], axis=-1))
    return jnp.concatenate(segs, axis=1)     # [B, Ltot, 3*C_in + D_mark]


def fuse_params(w_conv, w_time, w_pred_list, b_pred_list, w_proj, b_proj):
    """Offline algebraic folding of embedding + projection + per-scale biases.

    w_conv : [D, C_in, 3]   TokenEmbedding Conv1d weight (circular, no bias)
    w_time : [D, D_mark]    TimeFeatureEmbedding Linear weight (no bias)
    w_pred_list[i] : [P, L_i],  b_pred_list[i] : [P]
    w_proj : [C_out, D],  b_proj : [C_out]
    """
    wk = jnp.transpose(w_conv, (2, 1, 0))                                 # [3, C_in, D]
    w_stack = jnp.concatenate([wk[0], wk[1], wk[2], w_time.T], axis=0)    # [3C+Dm, D]
    wproj_t = w_proj.T                                                    # [D, C_out]
    wf = w_stack @ wproj_t                                                # [3C+Dm, C_out]
    wp_all = jnp.concatenate(w_pred_list, axis=1)                         # [P, Ltot]
    colsum = wproj_t.sum(axis=0)                                          # [C_out]
    n_scales = len(w_pred_list)
    b_pred_sum = jnp.stack(b_pred_list, axis=0).sum(axis=0)               # [P]
    b_all = b_pred_sum[:, None] * colsum[None, :] + n_scales * b_proj[None, :]
    return {"wf": wf, "wp_all": wp_all, "b_all": b_all}


@functools.partial(jax.jit, static_argnames=("scale_window", "scale_num"))
def trend_predit_forward(x_enc, x_mark, params, *, scale_window=2, scale_num=3):
    """Full Trend_Predit forward (multi-scale downsample + fused kernel)."""
    x_all = _build_multiscale_input(x_enc, x_mark, scale_window, scale_num)
    wf, wp_all, b_all = params["wf"], params["wp_all"], params["b_all"]
    B, Ltot, K = x_all.shape
    P, Cout = b_all.shape

    return pl.pallas_call(
        _trend_fused_kernel,
        out_shape=jax.ShapeDtypeStruct((B, P, Cout), jnp.float32),
        grid=(B,),
        in_specs=[
            pl.BlockSpec((1, Ltot, K), lambda b: (b, 0, 0)),
            pl.BlockSpec((K, Cout), lambda b: (0, 0)),
            pl.BlockSpec((P, Ltot), lambda b: (0, 0)),
            pl.BlockSpec((P, Cout), lambda b: (0, 0)),
        ],
        out_specs=pl.BlockSpec((1, P, Cout), lambda b: (b, 0, 0)),
        # "parallel": independent batch steps -> sharded across both TCs on v7x,
        # neutral on v5e/v6e.
        compiler_params=pltpu.CompilerParams(dimension_semantics=("parallel",)),
    )(x_all, wf, wp_all, b_all)


if __name__ == "__main__":
    # Small config consistent with the module's forward.
    B, seq_len, pred_len = 2, 16, 8
    enc_in, d_model, c_out = 4, 32, 4
    d_mark = 4                      # embed='timeF', freq='h' -> 4 time features
    scale_window, scale_num = 2, 3

    key = jax.random.PRNGKey(0)
    ks = jax.random.split(key, 16)

    x_enc = jax.random.normal(ks[0], (B, seq_len, enc_in), jnp.float32)
    x_mark = jax.random.normal(ks[1], (B, seq_len, d_mark), jnp.float32)

    # Deterministic parameter init (synthetic weights, PyTorch layouts).
    w_conv = 0.1 * jax.random.normal(ks[2], (d_model, enc_in, 3), jnp.float32)   # TokenEmbedding conv
    w_time = 0.1 * jax.random.normal(ks[3], (d_model, d_mark), jnp.float32)      # timeF Linear (no bias)
    w_pred, b_pred = [], []
    for i in range(scale_num + 1):
        Li = seq_len // scale_window ** i
        w_pred.append(0.1 * jax.random.normal(ks[4 + i], (pred_len, Li), jnp.float32))
        b_pred.append(0.1 * jax.random.normal(ks[8 + i], (pred_len,), jnp.float32))
    w_proj = 0.1 * jax.random.normal(ks[12], (c_out, d_model), jnp.float32)
    b_proj = 0.1 * jax.random.normal(ks[13], (c_out,), jnp.float32)

    params = fuse_params(w_conv, w_time, w_pred, b_pred, w_proj, b_proj)

    out = trend_predit_forward(x_enc, x_mark, params,
                               scale_window=scale_window, scale_num=scale_num)
    out = jax.block_until_ready(out)
    assert out.shape == (B, pred_len, c_out)

    # Pure-JAX reference mirroring the unfused PyTorch module (per-scale embed,
    # predict, project; projected outputs summed over scales).
    def reference():
        wk = jnp.transpose(w_conv, (2, 1, 0))   # [3, C_in, D]
        wt = w_time.T                           # [D_mark, D]
        total = jnp.zeros((B, pred_len, c_out), jnp.float32)
        x_c, m_c = x_enc, x_mark
        for i in range(scale_num + 1):
            if i > 0:
                Bc, Lc, Cc = x_c.shape
                x_c = x_c.reshape(Bc, Lc // scale_window, scale_window, Cc).mean(axis=2)
                m_c = m_c[:, ::scale_window, :]
            emb = (jnp.roll(x_c, 1, axis=1) @ wk[0] + x_c @ wk[1]
                   + jnp.roll(x_c, -1, axis=1) @ wk[2] + m_c @ wt)
            dec = jnp.einsum("pl,bld->bpd", w_pred[i], emb) + b_pred[i][None, :, None]
            total = total + dec @ w_proj.T + b_proj[None, None, :]
        return total

    ref_out = jax.block_until_ready(reference())
    assert jnp.allclose(out, ref_out, atol=1e-3, rtol=1e-3), (
        float(jnp.max(jnp.abs(out - ref_out))))

    print("KERNEL_OK")
</pallas_src>

<mosaic_0001>
module attributes {stable_mosaic.version = 11 : i64} {
  func.func @_trend_fused_kernel(%arg0: i32, %arg1: memref<1x30x16xf32, #tpu.memory_space<vmem>>, %arg2: memref<16x4xf32, #tpu.memory_space<vmem>>, %arg3: memref<8x30xf32, #tpu.memory_space<vmem>>, %arg4: memref<8x4xf32, #tpu.memory_space<vmem>>, %arg5: memref<1x8x4xf32, #tpu.memory_space<vmem>>) attributes {dimension_semantics = [#tpu.dimension_semantics<parallel>], iteration_bounds = array<i64: 2>, scalar_prefetch = 0 : i64, scratch_operands = 0 : i64, tpu.core_type = #tpu.core_type<tc>, window_params = [{transform_indices = @transform_0, window_bounds = array<i64: 1, 30, 16>}, {pipeline_mode = #tpu.pipeline_mode<synchronous>, transform_indices = @transform_1, window_bounds = array<i64: 16, 4>}, {pipeline_mode = #tpu.pipeline_mode<synchronous>, transform_indices = @transform_2, window_bounds = array<i64: 8, 30>}, {pipeline_mode = #tpu.pipeline_mode<synchronous>, transform_indices = @transform_3, window_bounds = array<i64: 8, 4>}, {transform_indices = @transform_4, window_bounds = array<i64: 1, 8, 4>}]} {
    %c0 = arith.constant 0 : index
    %c0_0 = arith.constant 0 : index
    %c0_1 = arith.constant 0 : index
    %0 = vector.load %arg1[%c0, %c0_0, %c0_1] : memref<1x30x16xf32, #tpu.memory_space<vmem>>, vector<1x30x16xf32>
    %1 = vector.shape_cast %0 : vector<1x30x16xf32> to vector<30x16xf32>
    %c0_2 = arith.constant 0 : index
    %c0_3 = arith.constant 0 : index
    %2 = vector.load %arg2[%c0_2, %c0_3] : memref<16x4xf32, #tpu.memory_space<vmem>>, vector<16x4xf32>
    %cst = arith.constant dense<0.000000e+00> : vector<30x4xf32>
    %3 = tpu.matmul %1, %2, %cst {dimension_numbers = #tpu.dot_dimension_numbers<[1], [0], [0], [1], [0, 0, 1, 1], [], []>} : vector<30x16xf32>, vector<16x4xf32>, vector<30x4xf32> -> vector<30x4xf32>
    %c0_4 = arith.constant 0 : index
    %c0_5 = arith.constant 0 : index
    %4 = vector.load %arg3[%c0_4, %c0_5] : memref<8x30xf32, #tpu.memory_space<vmem>>, vector<8x30xf32>
    %cst_6 = arith.constant dense<0.000000e+00> : vector<8x4xf32>
    %5 = tpu.matmul %4, %3, %cst_6 {dimension_numbers = #tpu.dot_dimension_numbers<[1], [0], [0], [1], [0, 0, 1, 1], [], []>} : vector<8x30xf32>, vector<30x4xf32>, vector<8x4xf32> -> vector<8x4xf32>
    %c0_7 = arith.constant 0 : index
    %c0_8 = arith.constant 0 : index
    %6 = vector.load %arg4[%c0_7, %c0_8] : memref<8x4xf32, #tpu.memory_space<vmem>>, vector<8x4xf32>
    %7 = arith.addf %5, %6 : vector<8x4xf32>
    %c0_9 = arith.constant 0 : index
    %c0_10 = arith.constant 0 : index
    %c0_11 = arith.constant 0 : index
    %8 = vector.load %arg5[%c0_9, %c0_10, %c0_11] : memref<1x8x4xf32, #tpu.memory_space<vmem>>, vector<1x8x4xf32>
    %9 = vector.shape_cast %8 : vector<1x8x4xf32> to vector<8x4xf32>
    %10 = vector.shape_cast %7 : vector<8x4xf32> to vector<1x8x4xf32>
    tpu.vector_store %arg5[%c0_9, %c0_10, %c0_11], %10 {strides = array<i32>} : memref<1x8x4xf32, #tpu.memory_space<vmem>>, vector<1x8x4xf32>,
    return
  }
  func.func @transform_0(%arg0: i32) -> (i32, i32, i32) {
    %c0_i32 = arith.constant 0 : i32
    %c0_i32_0 = arith.constant 0 : i32
    %c0_i32_1 = arith.constant 0 : i32
    return %arg0, %c0_i32, %c0_i32_0 : i32, i32, i32
  }
  func.func @transform_1(%arg0: i32) -> (i32, i32) {
    %c0_i32 = arith.constant 0 : i32
    %c0_i32_0 = arith.constant 0 : i32
    %c0_i32_1 = arith.constant 0 : i32
    return %c0_i32, %c0_i32_0 : i32, i32
  }
  func.func @transform_2(%arg0: i32) -> (i32, i32) {
    %c0_i32 = arith.constant 0 : i32
    %c0_i32_0 = arith.constant 0 : i32
    %c0_i32_1 = arith.constant 0 : i32
    return %c0_i32, %c0_i32_0 : i32, i32
  }
  func.func @transform_3(%arg0: i32) -> (i32, i32) {
    %c0_i32 = arith.constant 0 : i32
    %c0_i32_0 = arith.constant 0 : i32
    %c0_i32_1 = arith.constant 0 : i32
    return %c0_i32, %c0_i32_0 : i32, i32
  }
  func.func @transform_4(%arg0: i32) -> (i32, i32, i32) {
    %c0_i32 = arith.constant 0 : i32
    %c0_i32_0 = arith.constant 0 : i32
    %c0_i32_1 = arith.constant 0 : i32
    return %arg0, %c0_i32, %c0_i32_0 : i32, i32, i32
  }
}

</mosaic_0001>

<llo_original>
// kernel: trend_predit_forward.1
$region0: #{trend_predit_forward.1}
  #allocation0 [shape = 'u32[]', space=smem, size = 0x4, offset = 0x4, fixed_abs, tag = 'smem constant byte address 0x4 - core index']
  #allocation1 [shape = 'u32[144,128]{1,0:T(1,128)}', space=vmem, size = 0x12000, scoped, tag = 'internal scratch']
  %s0 = inlined_call_operand.vmem [shape: f32[2,30,16], index: 0, kind: input, shape index: {}]
  %s1 = inlined_call_operand.vmem [shape: f32[16,4], index: 1, kind: input, shape index: {}]
  %s2 = inlined_call_operand.vmem [shape: f32[8,30], index: 2, kind: input, shape index: {}]
  %s3 = inlined_call_operand.vmem [shape: f32[8,4], index: 3, kind: input, shape index: {}]
  %s4 = inlined_call_operand.vmem [shape: f32[2,8,4], index: 4, kind: output, shape index: {}]
  %s5 = sld [smem:[#allocation0]]
  $region49: #{trend_predit_forward.1} parent=0
    _
  %s7 = ssub.s32 1, %s5
  %s8 = scalar_select 0, %s7, %s5
  loop: start=0, step=1, limit=4
  $region2: #{trend_predit_forward.1} parent=0 // loop_pre_header
    _
  $region3: #{trend_predit_forward.1} parent=0 // loop_header
    %s10 = sphi 0, %s14
    %p11 = scmp.ge.s32.totalorder %s10, 4
    %s20 = sphi 0, %s22
    %s23 = sphi 0, %s20
    %s24 = sphi 0, %s23
    %s40 = sphi 0, %s24
    %s44 = sphi 0, %s44
    %s46 = sphi 0, %s44
    %s47 = sphi 0, %s46
    %s61 = sphi 0, %s47
    %s65 = sphi 0, %s65
    %s67 = sphi 0, %s65
    %s68 = sphi 0, %s67
    %s82 = sphi 0, %s68
    %s86 = sphi 0, %s86
    %s88 = sphi 0, %s86
    %s89 = sphi 0, %s88
    %s103 = sphi 0, %s89
    %s109 = sphi 0, %s111
    %s112 = sphi 0, %s109
    %s113 = sphi 0, %s112
    %s129 = sphi 0, %s113
  $region4: #{trend_predit_forward.1} parent=0 // loop_header_branch
    %13 = sbr.rel (%p11) target = $region8
  $region5: #{trend_predit_forward.1} parent=0 // loop_body
    %s15 = ssub.s32 %s10, 1
    %s16 = ssub.s32 %s10, 2
    %s17 = sadd.s32 %s10, 1
    %s18 = ssub.s32 %s10, %s17
    %p19 = scmp.eq.s32.totalorder %s18, 0
    %s21 = sadd.s32 %s20, 1
    %s22 = scalar_select %p19, %s20, %s21
    %p25 = pneg %p19
    %p26 = scmp.eq.s32.totalorder %s10, 1
    %p27 = por %p25, %p26
    %p28 = scmp.ne.s32.totalorder %s20, %s23
    %p29 = scmp.eq.s32.totalorder %s10, 0
    %p30 = por %p28, %p29
    %p31 = scmp.ne.s32.totalorder %s20, %s23
    %p32 = scmp.eq.s32.totalorder %s15, 1
    %p33 = por %p31, %p32
    %p34 = scmp.ne.s32.totalorder %s23, %s24
    %p35 = scmp.eq.s32.totalorder %s15, 0
    %p36 = por %p34, %p35
    %p37 = scmp.ne.s32.totalorder %s23, %s24
    %p38 = scmp.eq.s32.totalorder %s16, 1
    %p39 = por %p37, %p38
    %p41 = scmp.ne.s32.totalorder %s24, %s40
    %p42 = scmp.eq.s32.totalorder %s16, 0
    %p43 = por %p41, %p42
    %s45 = sadd.s32 %s44, 1
    %p48 = scmp.eq.s32.totalorder %s10, 1
    %p49 = scmp.ne.s32.totalorder %s44, %s46
    %p50 = scmp.eq.s32.totalorder %s10, 0
    %p51 = por %p49, %p50
    %p52 = scmp.ne.s32.totalorder %s44, %s46
    %p53 = scmp.eq.s32.totalorder %s15, 1
    %p54 = por %p52, %p53
    %p55 = scmp.ne.s32.totalorder %s46, %s47
    %p56 = scmp.eq.s32.totalorder %s15, 0
    %p57 = por %p55, %p56
    %p58 = scmp.ne.s32.totalorder %s46, %s47
    %p59 = scmp.eq.s32.totalorder %s16, 1
    %p60 = por %p58, %p59
    %p62 = scmp.ne.s32.totalorder %s47, %s61
    %p63 = scmp.eq.s32.totalorder %s16, 0
    %p64 = por %p62, %p63
    %s66 = sadd.s32 %s65, 1
    %p69 = scmp.eq.s32.totalorder %s10, 1
    %p70 = scmp.ne.s32.totalorder %s65, %s67
    %p71 = scmp.eq.s32.totalorder %s10, 0
    %p72 = por %p70, %p71
    %p73 = scmp.ne.s32.totalorder %s65, %s67
    %p74 = scmp.eq.s32.totalorder %s15, 1
    %p75 = por %p73, %p74
    %p76 = scmp.ne.s32.totalorder %s67, %s68
    %p77 = scmp.eq.s32.totalorder %s15, 0
    %p78 = por %p76, %p77
    %p79 = scmp.ne.s32.totalorder %s67, %s68
    %p80 = scmp.eq.s32.totalorder %s16, 1
    %p81 = por %p79, %p80
    %p83 = scmp.ne.s32.totalorder %s68, %s82
    %p84 = scmp.eq.s32.totalorder %s16, 0
    %p85 = por %p83, %p84
    %s87 = sadd.s32 %s86, 1
    %p90 = scmp.eq.s32.totalorder %s10, 1
    %p91 = scmp.ne.s32.totalorder %s86, %s88
    %p92 = scmp.eq.s32.totalorder %s10, 0
    %p93 = por %p91, %p92
    %p94 = scmp.ne.s32.totalorder %s86, %s88
    %p95 = scmp.eq.s32.totalorder %s15, 1
    %p96 = por %p94, %p95
    %p97 = scmp.ne.s32.totalorder %s88, %s89
    %p98 = scmp.eq.s32.totalorder %s15, 0
    %p99 = por %p97, %p98
    %p100 = scmp.ne.s32.totalorder %s88, %s89
    %p101 = scmp.eq.s32.totalorder %s16, 1
    %p102 = por %p100, %p101
    %p104 = scmp.ne.s32.totalorder %s89, %s103
    %p105 = scmp.eq.s32.totalorder %s16, 0
    %p106 = por %p104, %p105
    %s107 = ssub.s32 %s10, %s17
    %p108 = scmp.eq.s32.totalorder %s107, 0
    %s110 = sadd.s32 %s109, 1
    %s111 = scalar_select %p108, %s109, %s110
    %p114 = pneg %p108
    %p115 = scmp.eq.s32.totalorder %s10, 1
    %p116 = por %p114, %p115
    %p117 = scmp.ne.s32.totalorder %s109, %s112
    %p118 = scmp.eq.s32.totalorder %s10, 0
    %p119 = por %p117, %p118
    %p120 = scmp.ne.s32.totalorder %s109, %s112
    %p121 = scmp.eq.s32.totalorder %s15, 1
    %p122 = por %p120, %p121
    %p123 = scmp.ne.s32.totalorder %s112, %s113
    %p124 = scmp.eq.s32.totalorder %s15, 0
    %p125 = por %p123, %p124
    %p126 = scmp.ne.s32.totalorder %s112, %s113
    %p127 = scmp.eq.s32.totalorder %s16, 1
    %p128 = por %p126, %p127
    %p130 = scmp.ne.s32.totalorder %s113, %s129
    %p131 = scmp.eq.s32.totalorder %s16, 0
    %p132 = por %p130, %p131
    %p133 = scmp.le.s32.totalorder 1, %s10
    %p134 = scmp.lt.s32.totalorder %s10, 3
    %p135 = pnand %p133, %p134
    %p136 = pneg %p135
    // Predicated region
    $region9: #{trend_predit_forward.1} parent=5 // pred_check
      _
    $region10: #{trend_predit_forward.1} parent=5 // pred_check_branch
      %138 = sbr.rel (%p135) target = $region12
    $region11: #{trend_predit_forward.1} parent=5 // pred_region
      %s139 = ssub.s32 %s10, 1
      // Predicated region
      $region13: #{trend_predit_forward.1} parent=11 // pred_check
        %p140 = pneg %p57
      $region14: #{trend_predit_forward.1} parent=11 // pred_check_branch
        %142 = sbr.rel (%p140) target = $region16
      $region15: #{trend_predit_forward.1} parent=11 // pred_region
        _
      $region16: #{trend_predit_forward.1} parent=11 // pred_fallthru
        _
      // Predicated region
      $region17: #{trend_predit_forward.1} parent=11 // pred_check
        %p143 = pneg %p78
      $region18: #{trend_predit_forward.1} parent=11 // pred_check_branch
        %145 = sbr.rel (%p143) target = $region20
      $region19: #{trend_predit_forward.1} parent=11 // pred_region
        _
      $region20: #{trend_predit_forward.1} parent=11 // pred_fallthru
        _
      // Predicated region
      $region21: #{trend_predit_forward.1} parent=11 // pred_check
        %p146 = pneg %p99
      $region22: #{trend_predit_forward.1} parent=11 // pred_check_branch
        %148 = sbr.rel (%p146) target = $region24
      $region23: #{trend_predit_forward.1} parent=11 // pred_region
        _
      $region24: #{trend_predit_forward.1} parent=11 // pred_fallthru
        _
    $region12: #{trend_predit_forward.1} parent=5 // pred_fallthru
      _
    %p149 = scmp.lt.s32.totalorder %s10, 2
    // Predicated region
    $region25: #{trend_predit_forward.1} parent=5 // pred_check
      %p150 = pneg %p149
    $region26: #{trend_predit_forward.1} parent=5 // pred_check_branch
      %152 = sbr.rel (%p150) target = $region28
    $region27: #{trend_predit_forward.1} parent=5 // pred_region
      // Predicated region
      $region29: #{trend_predit_forward.1} parent=27 // pred_check
        %p153 = pneg %p30
      $region30: #{trend_predit_forward.1} parent=27 // pred_check_branch
        %155 = sbr.rel (%p153) target = $region32
      $region31: #{trend_predit_forward.1} parent=27 // pred_region
        %p156 = scmp.lt.s32.totalorder %s10, 1
        %s157 = scalar_select %p156, %s10, 1
        %s158 = smul.addr %s157, 4
        %s159 = smul.addr %s158, 8
        %s160 = scalar_lea.vmem %s0, %s159
      $region32: #{trend_predit_forward.1} parent=27 // pred_fallthru
        _
    $region28: #{trend_predit_forward.1} parent=5 // pred_fallthru
      _
    %p161 = scmp.le.s32.totalorder 1, %s10
    %p162 = scmp.lt.s32.totalorder %s10, 3
    %p163 = pnand %p161, %p162
    %p164 = pneg %p163
    // Predicated region
    $region33: #{trend_predit_forward.1} parent=5 // pred_check
      _
    $region34: #{trend_predit_forward.1} parent=5 // pred_check_branch
      %166 = sbr.rel (%p163) target = $region36
    $region35: #{trend_predit_forward.1} parent=5 // pred_region
      %s167 = ssub.s32 %s10, 1
      %p168 = scmp.lt.s32.totalorder %s15, 1
      %s169 = scalar_select %p168, %s15, 1
      %s170 = smul.addr %s169, 4
      %s171 = smul.addr %s170, 8
      %s172 = scalar_lea.vmem %s0, %s171
      %p173 = pneg %p36
      %p174 = pneg %p33
      %p175 = pneg %p57
      %p176 = pneg %p54
      %p177 = pneg %p78
      %p178 = pneg %p75
      %p179 = pneg %p99
      %p180 = pneg %p96
      %p181 = pneg %p125
      %p182 = pneg %p122
      %p183 = scmp.lt.s32.totalorder %s15, 1
      %s184 = scalar_select %p183, %s15, 1
      %s185 = smul.addr %s184, 8
      %s186 = scalar_lea.vmem %s4, %s185
      %p187 = scmp.lt.s32.totalorder %s15, 1
      %s188 = scalar_select %p187, %s15, 1
      %s189 = smul.addr %s188, 4
      %s190 = smul.addr %s189, 8
      %s191 = scalar_lea.vmem %s0, %s190
      %p192 = scmp.lt.s32.totalorder %s15, 1
      %s193 = scalar_select %p192, %s15, 1
      %s194 = smul.addr %s193, 8
      %s195 = scalar_lea.vmem %s4, %s194
      %v196 = vld [vmem:[%s191] sm:$0xff]
      %v197 = vld [vmem:[%s191 + $0x8] sm:$0xff]
      %v198 = vld [vmem:[%s191 + $0x10] sm:$0xff]
      %v199 = vld [vmem:[%s191 + $0x18] sm:$0x3f]
      %v200 = vld [vmem:[%s1] sm:$0xff]
      %v201 = vld [vmem:[%s1 + $0x8] sm:$0xff]
      %vm202 = vcmask 130048
      %v204 = vsel %vm202, %v196, 0
      %v207 = vsel %vm202, %v197, 0
      %v210 = vsel %vm202, %v198, 0
      %v213 = vsel %vm202, %v199, 0
      %215 = vmatprep.subr.mxu0 0.0
      %216 = vmatpush1.msra.mxu0 %v200
      %217 = vmatprep.subr.mxu0 0.0
      %218 = vmatpush1.msra.mxu0 %v201
      %219 = vmatprep.subr.mxu0 0.0
      %220 = vmatpush1.msra.mxu0 0.0
      %221 = vmatprep.subr.mxu0 0.0
      %222 = vmatpush1.msra.mxu0 0.0
      %223 = vmatprep.subr.mxu0 0.0
      %224 = vmatpush1.msra.mxu0 0.0
      %225 = vmatprep.subr.mxu0 0.0
      %226 = vmatpush1.msra.mxu0 0.0
      %227 = vmatprep.subr.mxu0 0.0
      %228 = vmatpush1.msra.mxu0 0.0
      %229 = vmatprep.subr.mxu0 0.0
      %230 = vmatpush1.msra.mxu0 0.0
      %231 = vmatprep.subr.mxu0 0.0
      %232 = vmatpush1.msra.mxu0 0.0
      %233 = vmatprep.subr.mxu0 0.0
      %234 = vmatpush1.msra.mxu0 0.0
      %235 = vmatprep.subr.mxu0 0.0
      %236 = vmatpush1.msra.mxu0 0.0
      %237 = vmatprep.subr.mxu0 0.0
      %238 = vmatpush1.msra.mxu0 0.0
      %239 = vmatprep.subr.mxu0 0.0
      %240 = vmatpush1.msra.mxu0 0.0
      %241 = vmatprep.subr.mxu0 0.0
      %242 = vmatpush1.msra.mxu0 0.0
      %243 = vmatprep.subr.mxu0 0.0
      %244 = vmatpush1.msra.mxu0 0.0
      %245 = vmatprep.subr.mxu0 0.0
      %246 = vmatpush1.msra.mxu0 0.0
      %247 = vmatprep.subr.mxu0 0.0
      %248 = vmatpush1.msra.mxu0 0.0
      %249 = vmatprep.subr.mxu0 0.0
      %250 = vmatpush1.msra.mxu0 0.0
      %251 = vmatprep.subr.mxu0 0.0
      %252 = vmatpush1.msra.mxu0 0.0
      %253 = vmatprep.subr.mxu0 0.0
      %254 = vmatpush1.msra.mxu0 0.0
      %255 = vmatprep.subr.mxu0 0.0
      %256 = vmatpush1.msra.mxu0 0.0
      %257 = vmatprep.subr.mxu0 0.0
      %258 = vmatpush1.msra.mxu0 0.0
      %259 = vmatprep.subr.mxu0 0.0
      %260 = vmatpush1.msra.mxu0 0.0
      %261 = vmatprep.subr.mxu0 0.0
      %262 = vmatpush1.msra.mxu0 0.0
      %263 = vmatprep.subr.mxu0 0.0
      %264 = vmatpush1.msra.mxu0 0.0
      %265 = vmatprep.subr.mxu0 0.0
      %266 = vmatpush1.msra.mxu0 0.0
      %267 = vmatprep.subr.mxu0 0.0
      %268 = vmatpush1.msra.mxu0 0.0
      %269 = vmatprep.subr.mxu0 0.0
      %270 = vmatpush1.msra.mxu0 0.0
      %271 = vmatprep.subr.mxu0 0.0
      %272 = vmatpush1.msra.mxu0 0.0
      %273 = vmatprep.subr.mxu0 0.0
      %274 = vmatpush1.msra.mxu0 0.0
      %275 = vmatprep.subr.mxu0 0.0
      %276 = vmatpush1.msra.mxu0 0.0
      %277 = vmatprep.subr.mxu0 0.0
      %278 = vmatpush1.msra.mxu0 0.0
      %279 = vmatprep.mubr.f32.mxu0 0.0
      %280 = vmatmul.mubr.f32.gmra.mrb[0].mxu0 %v204
      %v281 = vpop.f32.mrb[0].mxu0
      %v282 = vadd.f32 0.0, %v281
      %v283 = vpop.f32.mrb[0].mxu0
      %284 = vmatprep.mubr.f32.mxu0 0.0
      %285 = vmatmul.mubr.f32.gmra.mrb[0].mxu0 %v207
      %v286 = vpop.f32.mrb[0].mxu0
      %v287 = vadd.f32 0.0, %v286
      %v288 = vpop.f32.mrb[0].mxu0
      %289 = vmatprep.mubr.f32.mxu0 0.0
      %290 = vmatmul.mubr.f32.gmra.mrb[0].mxu0 %v210
      %v291 = vpop.f32.mrb[0].mxu0
      %v292 = vadd.f32 0.0, %v291
      %v293 = vpop.f32.mrb[0].mxu0
      %294 = vmatprep.mubr.f32.mxu0 0.0
      %295 = vmatmul.mubr.f32.gmra.mrb[0].mxu0 %v213
      %v296 = vpop.f32.mrb[0].mxu0
      %v297 = vadd.f32 0.0, %v296
      %v298 = vpop.f32.mrb[0].mxu0
      %299 = vdwg.mxu0
      %v300 = vld [vmem:[%s2] sm:$0xff]
      %v301 = vld [vmem:[%s3] sm:$0xff]
      %vm302 = vcmask 244736
      %v304 = vsel %vm302, %v300, 0
      %vm306 = vcmask 1045504
      %v308 = vsel %vm306, %v297, 0
      %310 = vmatprep.subr.mxu0 0.0
      %311 = vmatpush1.msra.mxu0 %v282
      %312 = vmatprep.subr.mxu0 0.0
      %313 = vmatpush1.msra.mxu0 %v287
      %314 = vmatprep.subr.mxu0 0.0
      %315 = vmatpush1.msra.mxu0 %v292
      %316 = vmatprep.subr.mxu0 0.0
      %317 = vmatpush1.msra.mxu0 %v308
      %318 = vmatprep.subr.mxu0 0.0
      %319 = vmatpush1.msra.mxu0 0.0
      %320 = vmatprep.subr.mxu0 0.0
      %321 = vmatpush1.msra.mxu0 0.0
      %322 = vmatprep.subr.mxu0 0.0
      %323 = vmatpush1.msra.mxu0 0.0
      %324 = vmatprep.subr.mxu0 0.0
      %325 = vmatpush1.msra.mxu0 0.0
      %326 = vmatprep.subr.mxu0 0.0
      %327 = vmatpush1.msra.mxu0 0.0
      %328 = vmatprep.subr.mxu0 0.0
      %329 = vmatpush1.msra.mxu0 0.0
      %330 = vmatprep.subr.mxu0 0.0
      %331 = vmatpush1.msra.mxu0 0.0
      %332 = vmatprep.subr.mxu0 0.0
      %333 = vmatpush1.msra.mxu0 0.0
      %334 = vmatprep.subr.mxu0 0.0
      %335 = vmatpush1.msra.mxu0 0.0
      %336 = vmatprep.subr.mxu0 0.0
      %337 = vmatpush1.msra.mxu0 0.0
      %338 = vmatprep.subr.mxu0 0.0
      %339 = vmatpush1.msra.mxu0 0.0
      %340 = vmatprep.subr.mxu0 0.0
      %341 = vmatpush1.msra.mxu0 0.0
      %342 = vmatprep.subr.mxu0 0.0
      %343 = vmatpush1.msra.mxu0 0.0
      %344 = vmatprep.subr.mxu0 0.0
      %345 = vmatpush1.msra.mxu0 0.0
      %346 = vmatprep.subr.mxu0 0.0
      %347 = vmatpush1.msra.mxu0 0.0
      %348 = vmatprep.subr.mxu0 0.0
      %349 = vmatpush1.msra.mxu0 0.0
      %350 = vmatprep.subr.mxu0 0.0
      %351 = vmatpush1.msra.mxu0 0.0
      %352 = vmatprep.subr.mxu0 0.0
      %353 = vmatpush1.msra.mxu0 0.0
      %354 = vmatprep.subr.mxu0 0.0
      %355 = vmatpush1.msra.mxu0 0.0
      %356 = vmatprep.subr.mxu0 0.0
      %357 = vmatpush1.msra.mxu0 0.0
      %358 = vmatprep.subr.mxu0 0.0
      %359 = vmatpush1.msra.mxu0 0.0
      %360 = vmatprep.subr.mxu0 0.0
      %361 = vmatpush1.msra.mxu0 0.0
      %362 = vmatprep.subr.mxu0 0.0
      %363 = vmatpush1.msra.mxu0 0.0
      %364 = vmatprep.subr.mxu0 0.0
      %365 = vmatpush1.msra.mxu0 0.0
      %366 = vmatprep.subr.mxu0 0.0
      %367 = vmatpush1.msra.mxu0 0.0
      %368 = vmatprep.subr.mxu0 0.0
      %369 = vmatpush1.msra.mxu0 0.0
      %370 = vmatprep.subr.mxu0 0.0
      %371 = vmatpush1.msra.mxu0 0.0
      %372 = vmatprep.subr.mxu0 0.0
      %373 = vmatpush1.msra.mxu0 0.0
      %374 = vmatprep.mubr.f32.mxu0 0.0
      %375 = vmatmul.mubr.f32.gmra.mrb[0].mxu0 %v304
      %v376 = vpop.f32.mrb[0].mxu0
      %v377 = vadd.f32 %v301, %v376
      %v378 = vpop.f32.mrb[0].mxu0
      %379 = vdwg.mxu0
      %vm380 = vcmask 31744
      %381 = vst.msk [vmem:[%s195] sm:$0xff] %vm380, %v377
      %p382 = scmp.lt.s32.totalorder %s15, 1
      %s383 = scalar_select %p382, %s15, 1
      %s384 = smul.addr %s383, 8
      %s385 = scalar_lea.vmem %s4, %s384
      // Predicated region
      $region37: #{trend_predit_forward.1} parent=35 // pred_check
        %p386 = pneg %p122
      $region38: #{trend_predit_forward.1} parent=35 // pred_check_branch
        %388 = sbr.rel (%p386) target = $region40
      $region39: #{trend_predit_forward.1} parent=35 // pred_region
        _
      $region40: #{trend_predit_forward.1} parent=35 // pred_fallthru
        _
    $region36: #{trend_predit_forward.1} parent=5 // pred_fallthru
      _
    %p389 = scmp.le.s32.totalorder 2, %s10
    // Predicated region
    $region41: #{trend_predit_forward.1} parent=5 // pred_check
      %p390 = pneg %p389
    $region42: #{trend_predit_forward.1} parent=5 // pred_check_branch
      %392 = sbr.rel (%p390) target = $region44
    $region43: #{trend_predit_forward.1} parent=5 // pred_region
      %s393 = ssub.s32 %s10, 2
      // Predicated region
      $region45: #{trend_predit_forward.1} parent=43 // pred_check
        %p394 = pneg %p128
      $region46: #{trend_predit_forward.1} parent=43 // pred_check_branch
        %396 = sbr.rel (%p394) target = $region48
      $region47: #{trend_predit_forward.1} parent=43 // pred_region
        %p397 = scmp.lt.s32.totalorder %s16, 1
        %s398 = scalar_select %p397, %s16, 1
        %s399 = smul.addr %s398, 8
        %s400 = scalar_lea.vmem %s4, %s399
      $region48: #{trend_predit_forward.1} parent=43 // pred_fallthru
        _
    $region44: #{trend_predit_forward.1} parent=5 // pred_fallthru
      _
  $region6: #{trend_predit_forward.1} parent=0 // loop_footer
    %s14 = sadd.s32 1, %s10
  $region7: #{trend_predit_forward.1} parent=0 // loop_footer_branch
    %9 = sbr.rel target = $region3
  $region8: #{trend_predit_forward.1} parent=0 // loop_exit
    _

</llo_original>
